<compile_context>
chip_gen: v5e
topology: v5e:2x2
jax: 0.10.0
libtpu: 0.0.40
codegen_flags: <defaults>
</compile_context>

<pallas_src>
import functools

import jax
import jax.numpy as jnp
from jax.experimental import pallas as pl
from jax.experimental.pallas import tpu as pltpu

_IN_FEATURES = 784
_NUM_CLASSES = 10
_CLASS_PAD = 128       # lane-dense output store (avoid masked vst on 10 lanes)
_NEG_BIAS = -1e30      # padded-class bias -> exp() == 0 inside log_softmax
_VMEM_BUDGET = 48 << 20  # stay comfortably under v7x's 64 MiB per-TC VMEM


def _round_up(x, m):
    return ((x + m - 1) // m) * m


def _cdiv(a, d):
    return -(-a // d)


def _mlp_kernel(x_ref, w1_ref, b1_ref, w2_ref, b2_ref, w3_ref, b3_ref,
                w4_ref, b4_ref, o_ref):
    """One batch tile: fc1->ReLU->fc2->ReLU->fc3->ReLU->fc4->log_softmax."""
    # f32 -> bf16 cast done in-kernel (VPU work, hidden under the x DMA) so the
    # wrapper never makes a separate preprocessing pass over x.
    x = x_ref[...].astype(jnp.bfloat16)                               # [tb, 784]

    h = jnp.dot(x, w1_ref[...], preferred_element_type=jnp.float32) + b1_ref[...]
    h = jnp.maximum(h, 0.0).astype(jnp.bfloat16)                      # ReLU in f32

    h = jnp.dot(h, w2_ref[...], preferred_element_type=jnp.float32) + b2_ref[...]
    h = jnp.maximum(h, 0.0).astype(jnp.bfloat16)

    h = jnp.dot(h, w3_ref[...], preferred_element_type=jnp.float32) + b3_ref[...]
    h = jnp.maximum(h, 0.0).astype(jnp.bfloat16)

    logits = jnp.dot(h, w4_ref[...], preferred_element_type=jnp.float32) + b4_ref[...]

    # Numerically stable log_softmax over the padded class axis.  Padded class
    # logits sit at ~-1e30 so exp() == 0 and the result equals the 10-class one.
    m = jnp.max(logits, axis=1, keepdims=True)
    shifted = logits - m
    lse = jnp.log(jnp.sum(jnp.exp(shifted), axis=1, keepdims=True))
    o_ref[...] = (shifted - lse).astype(o_ref.dtype)


def _choose_tiles(b, tile_b, per_row_vmem_bytes):
    """Balanced batch tiles, >=2 grid steps, sublane-aligned, VMEM-bounded."""
    # Cap the tile so the double-buffered footprint fits the VMEM budget.
    max_tb = max(256, (_VMEM_BUDGET // per_row_vmem_bytes) // 8 * 8)
    tile_b = min(tile_b, max_tb)
    num_tiles = max(2, _cdiv(b, tile_b))           # >=2 -> both v7x TCs get work
    tb = _round_up(_cdiv(b, num_tiles), 8)         # balanced, multiple of 8
    num_tiles = max(2, _cdiv(b, tb))               # rebalance after rounding
    b_pad = tb * num_tiles
    return tb, b_pad, num_tiles


def mnist_fc_forward(x_nchw, params, *, tile_b=2048):
    """x_nchw: [B, 1, 28, 28] float32 -> log-probs [B, 10] float32."""
    b = x_nchw.shape[0]
    w1, b1, w2, b2, w3, b3, w4, b4 = params
    hidden = w1.shape[1]
    h_pad = _round_up(hidden, 128)                 # lane-dense intermediates

    # ---- x: just a (free) reshape; no cast / feature pad in the wrapper -----
    x = x_nchw.reshape(b, -1)                      # nn.Flatten(), stays f32

    # Per-row VMEM cost: double-buffered x/out tiles + in-kernel temporaries.
    wide = max(h_pad, _CLASS_PAD)
    per_row = (2 * (_IN_FEATURES * 4 + _CLASS_PAD * 4)   # x/out, double-buffered
               + _IN_FEATURES * 2                        # bf16 copy of x tile
               + 8 * wide * 4)                           # h/logits/softmax temps
    tb, b_pad, num_tiles = _choose_tiles(b, tile_b, per_row)
    if b_pad != b:                                  # only pad when unavoidable
        x = jnp.pad(x, ((0, b_pad - b), (0, 0)))    # zero tail rows

    # ---- weights: bf16, hidden padded to h_pad, classes padded to 128 -------
    def pad2(a, rows, cols, cval=0.0):
        return jnp.pad(a, ((0, rows - a.shape[0]), (0, cols - a.shape[1])),
                       constant_values=cval)

    w1p = pad2(w1, _IN_FEATURES, h_pad).astype(jnp.bfloat16)
    w2p = pad2(w2, h_pad, h_pad).astype(jnp.bfloat16)
    w3p = pad2(w3, h_pad, h_pad).astype(jnp.bfloat16)
    w4p = pad2(w4, h_pad, _CLASS_PAD).astype(jnp.bfloat16)
    # Biases stay f32 (added to the f32 MXU accumulator); padded hidden cols are
    # zero, padded class cols get a huge negative value.
    b1p = pad2(b1.astype(jnp.float32), 1, h_pad)
    b2p = pad2(b2.astype(jnp.float32), 1, h_pad)
    b3p = pad2(b3.astype(jnp.float32), 1, h_pad)
    b4p = pad2(b4.astype(jnp.float32), 1, _CLASS_PAD, cval=_NEG_BIAS)

    weights = (w1p, b1p, w2p, b2p, w3p, b3p, w4p, b4p)

    # ---- specs --------------------------------------------------------------
    x_spec = pl.BlockSpec((tb, _IN_FEATURES), lambda i: (i, 0))
    out_spec = pl.BlockSpec((tb, _CLASS_PAD), lambda i: (i, 0))

    def resident_spec(arr):
        nd = arr.ndim
        return pl.BlockSpec(arr.shape, lambda i, _nd=nd: (0,) * _nd)

    out_shape = jax.ShapeDtypeStruct((b_pad, _CLASS_PAD), jnp.float32)

    # Honest VMEM budget: double-buffered x/out tiles, single-buffered resident
    # weights (constant index maps -> fetched once), kernel temporaries, headroom.
    x_tile_bytes = tb * _IN_FEATURES * 4
    out_tile_bytes = tb * _CLASS_PAD * 4
    weight_bytes = sum(a.size * a.dtype.itemsize for a in weights)
    tmp_bytes = tb * _IN_FEATURES * 2 + 8 * tb * wide * 4
    vmem_limit = int(2 * (x_tile_bytes + out_tile_bytes) + weight_bytes
                     + tmp_bytes + (4 << 20))
    vmem_limit = min(vmem_limit, 64 << 20)

    fn = pl.pallas_call(
        _mlp_kernel,
        out_shape=out_shape,
        grid_spec=pltpu.PrefetchScalarGridSpec(
            num_scalar_prefetch=0,
            grid=(num_tiles,),
            in_specs=[x_spec] + [resident_spec(a) for a in weights],
            out_specs=out_spec,
        ),
        compiler_params=pltpu.CompilerParams(
            dimension_semantics=("parallel",),
            vmem_limit_bytes=vmem_limit,
        ),
    )
    out_padded = fn(x, *weights)
    return out_padded[:b, :_NUM_CLASSES]


def init_params(key, hidden_size=32, in_features=784, num_classes=10):
    """Deterministic synthetic parameters (Kaiming-ish scaling).

    Weights are stored as [in, out] (already transposed vs. PyTorch's
    [out, in]); biases as [1, out] for 2-D VMEM blocks.
    """
    dims = [(in_features, hidden_size),
            (hidden_size, hidden_size),
            (hidden_size, hidden_size),
            (hidden_size, num_classes)]
    params = []
    keys = jax.random.split(key, len(dims) * 2)
    for i, (fan_in, fan_out) in enumerate(dims):
        wk, bk = keys[2 * i], keys[2 * i + 1]
        bound = 1.0 / jnp.sqrt(fan_in)
        w = jax.random.uniform(wk, (fan_in, fan_out), jnp.float32, -bound, bound)
        bias = jax.random.uniform(bk, (1, fan_out), jnp.float32, -bound, bound)
        params += [w, bias]
    return tuple(params)


def reference_forward(x_nchw, params):
    """Plain-JAX reference mirroring the kernel's bf16 operand precision."""
    b = x_nchw.shape[0]
    dot = functools.partial(jnp.dot, precision=jax.lax.Precision.HIGHEST,
                            preferred_element_type=jnp.float32)
    bf = lambda a: a.astype(jnp.bfloat16).astype(jnp.float32)
    x = bf(x_nchw.reshape(b, -1))
    w1, b1, w2, b2, w3, b3, w4, b4 = params
    h = jnp.maximum(dot(x, bf(w1)) + b1, 0.0)
    h = jnp.maximum(dot(bf(h), bf(w2)) + b2, 0.0)
    h = jnp.maximum(dot(bf(h), bf(w3)) + b3, 0.0)
    logits = dot(bf(h), bf(w4)) + b4
    return jax.nn.log_softmax(logits, axis=1)


if __name__ == "__main__":
    key = jax.random.PRNGKey(0)
    k_x, k_p = jax.random.split(key)

    batch, hidden = 2, 32
    x = jax.random.normal(k_x, (batch, 1, 28, 28), dtype=jnp.float32)
    params = init_params(k_p, hidden_size=hidden)

    out = mnist_fc_forward(x, params)
    out = jax.block_until_ready(out)

    ref = reference_forward(x, params)
    assert out.shape == (batch, 10), out.shape
    assert jnp.allclose(out, ref, atol=1e-4, rtol=1e-4), float(
        jnp.max(jnp.abs(out - ref)))

    print("KERNEL_OK")
</pallas_src>

<mosaic_0001>
module attributes {stable_mosaic.version = 11 : i64} {
  func.func @_mlp_kernel(%arg0: i32, %arg1: memref<8x784xf32, #tpu.memory_space<vmem>>, %arg2: memref<784x128xbf16, #tpu.memory_space<vmem>>, %arg3: memref<1x128xf32, #tpu.memory_space<vmem>>, %arg4: memref<128x128xbf16, #tpu.memory_space<vmem>>, %arg5: memref<1x128xf32, #tpu.memory_space<vmem>>, %arg6: memref<128x128xbf16, #tpu.memory_space<vmem>>, %arg7: memref<1x128xf32, #tpu.memory_space<vmem>>, %arg8: memref<128x128xbf16, #tpu.memory_space<vmem>>, %arg9: memref<1x128xf32, #tpu.memory_space<vmem>>, %arg10: memref<8x128xf32, #tpu.memory_space<vmem>>) attributes {dimension_semantics = [#tpu.dimension_semantics<parallel>], iteration_bounds = array<i64: 2>, scalar_prefetch = 0 : i64, scratch_operands = 0 : i64, tpu.core_type = #tpu.core_type<tc>, window_params = [{transform_indices = @transform_0, window_bounds = array<i64: 8, 784>}, {pipeline_mode = #tpu.pipeline_mode<synchronous>, transform_indices = @transform_1, window_bounds = array<i64: 784, 128>}, {pipeline_mode = #tpu.pipeline_mode<synchronous>, transform_indices = @transform_2, window_bounds = array<i64: 1, 128>}, {pipeline_mode = #tpu.pipeline_mode<synchronous>, transform_indices = @transform_3, window_bounds = array<i64: 128, 128>}, {pipeline_mode = #tpu.pipeline_mode<synchronous>, transform_indices = @transform_4, window_bounds = array<i64: 1, 128>}, {pipeline_mode = #tpu.pipeline_mode<synchronous>, transform_indices = @transform_5, window_bounds = array<i64: 128, 128>}, {pipeline_mode = #tpu.pipeline_mode<synchronous>, transform_indices = @transform_6, window_bounds = array<i64: 1, 128>}, {pipeline_mode = #tpu.pipeline_mode<synchronous>, transform_indices = @transform_7, window_bounds = array<i64: 128, 128>}, {pipeline_mode = #tpu.pipeline_mode<synchronous>, transform_indices = @transform_8, window_bounds = array<i64: 1, 128>}, {transform_indices = @transform_9, window_bounds = array<i64: 8, 128>}]} {
    %c0 = arith.constant 0 : index
    %c0_0 = arith.constant 0 : index
    %0 = vector.load %arg1[%c0, %c0_0] : memref<8x784xf32, #tpu.memory_space<vmem>>, vector<8x784xf32>
    %1 = arith.truncf %0 : vector<8x784xf32> to vector<8x784xbf16>
    %c0_1 = arith.constant 0 : index
    %c0_2 = arith.constant 0 : index
    %2 = vector.load %arg2[%c0_1, %c0_2] : memref<784x128xbf16, #tpu.memory_space<vmem>>, vector<784x128xbf16>
    %cst = arith.constant dense<0.000000e+00> : vector<8x128xf32>
    %3 = tpu.matmul %1, %2, %cst {dimension_numbers = #tpu.dot_dimension_numbers<[1], [0], [0], [1], [0, 0, 1, 1], [], []>} : vector<8x784xbf16>, vector<784x128xbf16>, vector<8x128xf32> -> vector<8x128xf32>
    %c0_3 = arith.constant 0 : index
    %c0_4 = arith.constant 0 : index
    %4 = vector.load %arg3[%c0_3, %c0_4] : memref<1x128xf32, #tpu.memory_space<vmem>>, vector<1x128xf32>
    %5 = vector.broadcast %4 : vector<1x128xf32> to vector<8x128xf32>
    %6 = arith.addf %3, %5 : vector<8x128xf32>
    %cst_5 = arith.constant 0.000000e+00 : f32
    %7 = vector.broadcast %cst_5 : f32 to vector<8x128xf32>
    %8 = arith.maximumf %6, %7 : vector<8x128xf32>
    %9 = arith.truncf %8 : vector<8x128xf32> to vector<8x128xbf16>
    %c0_6 = arith.constant 0 : index
    %c0_7 = arith.constant 0 : index
    %10 = vector.load %arg4[%c0_6, %c0_7] : memref<128x128xbf16, #tpu.memory_space<vmem>>, vector<128x128xbf16>
    %cst_8 = arith.constant dense<0.000000e+00> : vector<8x128xf32>
    %11 = tpu.matmul %9, %10, %cst_8 {dimension_numbers = #tpu.dot_dimension_numbers<[1], [0], [0], [1], [0, 0, 1, 1], [], []>} : vector<8x128xbf16>, vector<128x128xbf16>, vector<8x128xf32> -> vector<8x128xf32>
    %c0_9 = arith.constant 0 : index
    %c0_10 = arith.constant 0 : index
    %12 = vector.load %arg5[%c0_9, %c0_10] : memref<1x128xf32, #tpu.memory_space<vmem>>, vector<1x128xf32>
    %13 = vector.broadcast %12 : vector<1x128xf32> to vector<8x128xf32>
    %14 = arith.addf %11, %13 : vector<8x128xf32>
    %cst_11 = arith.constant 0.000000e+00 : f32
    %15 = vector.broadcast %cst_11 : f32 to vector<8x128xf32>
    %16 = arith.maximumf %14, %15 : vector<8x128xf32>
    %17 = arith.truncf %16 : vector<8x128xf32> to vector<8x128xbf16>
    %c0_12 = arith.constant 0 : index
    %c0_13 = arith.constant 0 : index
    %18 = vector.load %arg6[%c0_12, %c0_13] : memref<128x128xbf16, #tpu.memory_space<vmem>>, vector<128x128xbf16>
    %cst_14 = arith.constant dense<0.000000e+00> : vector<8x128xf32>
    %19 = tpu.matmul %17, %18, %cst_14 {dimension_numbers = #tpu.dot_dimension_numbers<[1], [0], [0], [1], [0, 0, 1, 1], [], []>} : vector<8x128xbf16>, vector<128x128xbf16>, vector<8x128xf32> -> vector<8x128xf32>
    %c0_15 = arith.constant 0 : index
    %c0_16 = arith.constant 0 : index
    %20 = vector.load %arg7[%c0_15, %c0_16] : memref<1x128xf32, #tpu.memory_space<vmem>>, vector<1x128xf32>
    %21 = vector.broadcast %20 : vector<1x128xf32> to vector<8x128xf32>
    %22 = arith.addf %19, %21 : vector<8x128xf32>
    %cst_17 = arith.constant 0.000000e+00 : f32
    %23 = vector.broadcast %cst_17 : f32 to vector<8x128xf32>
    %24 = arith.maximumf %22, %23 : vector<8x128xf32>
    %25 = arith.truncf %24 : vector<8x128xf32> to vector<8x128xbf16>
    %c0_18 = arith.constant 0 : index
    %c0_19 = arith.constant 0 : index
    %26 = vector.load %arg8[%c0_18, %c0_19] : memref<128x128xbf16, #tpu.memory_space<vmem>>, vector<128x128xbf16>
    %cst_20 = arith.constant dense<0.000000e+00> : vector<8x128xf32>
    %27 = tpu.matmul %25, %26, %cst_20 {dimension_numbers = #tpu.dot_dimension_numbers<[1], [0], [0], [1], [0, 0, 1, 1], [], []>} : vector<8x128xbf16>, vector<128x128xbf16>, vector<8x128xf32> -> vector<8x128xf32>
    %c0_21 = arith.constant 0 : index
    %c0_22 = arith.constant 0 : index
    %28 = vector.load %arg9[%c0_21, %c0_22] : memref<1x128xf32, #tpu.memory_space<vmem>>, vector<1x128xf32>
    %29 = vector.broadcast %28 : vector<1x128xf32> to vector<8x128xf32>
    %30 = arith.addf %27, %29 : vector<8x128xf32>
    %cst_23 = arith.constant dense<0xFF800000> : vector<8xf32>
    %31 = vector.multi_reduction <maximumf>, %30, %cst_23 [1] : vector<8x128xf32> to vector<8xf32>
    %32 = vector.shape_cast %31 : vector<8xf32> to vector<8x1xf32>
    %33 = vector.broadcast %32 : vector<8x1xf32> to vector<8x128xf32>
    %34 = arith.subf %30, %33 : vector<8x128xf32>
    %35 = math.exp %34 : vector<8x128xf32>
    %cst_24 = arith.constant dense<0.000000e+00> : vector<8xf32>
    %36 = vector.multi_reduction <add>, %35, %cst_24 [1] : vector<8x128xf32> to vector<8xf32>
    %37 = vector.shape_cast %36 : vector<8xf32> to vector<8x1xf32>
    %38 = math.log %37 : vector<8x1xf32>
    %39 = vector.broadcast %38 : vector<8x1xf32> to vector<8x128xf32>
    %40 = arith.subf %34, %39 : vector<8x128xf32>
    %c0_25 = arith.constant 0 : index
    %c0_26 = arith.constant 0 : index
    %41 = vector.load %arg10[%c0_25, %c0_26] : memref<8x128xf32, #tpu.memory_space<vmem>>, vector<8x128xf32>
    tpu.vector_store %arg10[%c0_25, %c0_26], %40 {strides = array<i32>} : memref<8x128xf32, #tpu.memory_space<vmem>>, vector<8x128xf32>,
    return
  }
  func.func @transform_0(%arg0: i32) -> (i32, i32) {
    %c0_i32 = arith.constant 0 : i32
    %c0_i32_0 = arith.constant 0 : i32
    return %arg0, %c0_i32 : i32, i32
  }
  func.func @transform_1(%arg0: i32) -> (i32, i32) {
    %c0_i32 = arith.constant 0 : i32
    %c0_i32_0 = arith.constant 0 : i32
    %c0_i32_1 = arith.constant 0 : i32
    return %c0_i32, %c0_i32_0 : i32, i32
  }
  func.func @transform_2(%arg0: i32) -> (i32, i32) {
    %c0_i32 = arith.constant 0 : i32
    %c0_i32_0 = arith.constant 0 : i32
    %c0_i32_1 = arith.constant 0 : i32
    return %c0_i32, %c0_i32_0 : i32, i32
  }
  func.func @transform_3(%arg0: i32) -> (i32, i32) {
    %c0_i32 = arith.constant 0 : i32
    %c0_i32_0 = arith.constant 0 : i32
    %c0_i32_1 = arith.constant 0 : i32
    return %c0_i32, %c0_i32_0 : i32, i32
  }
  func.func @transform_4(%arg0: i32) -> (i32, i32) {
    %c0_i32 = arith.constant 0 : i32
    %c0_i32_0 = arith.constant 0 : i32
    %c0_i32_1 = arith.constant 0 : i32
    return %c0_i32, %c0_i32_0 : i32, i32
  }
  func.func @transform_5(%arg0: i32) -> (i32, i32) {
    %c0_i32 = arith.constant 0 : i32
    %c0_i32_0 = arith.constant 0 : i32
    %c0_i32_1 = arith.constant 0 : i32
    return %c0_i32, %c0_i32_0 : i32, i32
  }
  func.func @transform_6(%arg0: i32) -> (i32, i32) {
    %c0_i32 = arith.constant 0 : i32
    %c0_i32_0 = arith.constant 0 : i32
    %c0_i32_1 = arith.constant 0 : i32
    return %c0_i32, %c0_i32_0 : i32, i32
  }
  func.func @transform_7(%arg0: i32) -> (i32, i32) {
    %c0_i32 = arith.constant 0 : i32
    %c0_i32_0 = arith.constant 0 : i32
    %c0_i32_1 = arith.constant 0 : i32
    return %c0_i32, %c0_i32_0 : i32, i32
  }
  func.func @transform_8(%arg0: i32) -> (i32, i32) {
    %c0_i32 = arith.constant 0 : i32
    %c0_i32_0 = arith.constant 0 : i32
    %c0_i32_1 = arith.constant 0 : i32
    return %c0_i32, %c0_i32_0 : i32, i32
  }
  func.func @transform_9(%arg0: i32) -> (i32, i32) {
    %c0_i32 = arith.constant 0 : i32
    %c0_i32_0 = arith.constant 0 : i32
    return %arg0, %c0_i32 : i32, i32
  }
}

</mosaic_0001>

<llo_original>
// kernel: tpu_custom_call.1
$region0: #{tpu_custom_call.1}
  #allocation0 [shape = 'u32[]', space=smem, size = 0x4, offset = 0x4, fixed_abs, tag = 'smem constant byte address 0x4 - core index']
  #allocation1 [shape = 'u32[72,128]{1,0:T(1,128)}', space=vmem, size = 0x9000, scoped, tag = 'internal scratch']
  %s0 = inlined_call_operand.hbm [shape: f32[16,784], index: 0, kind: input, shape index: {}]
  %s1 = inlined_call_operand.hbm [shape: bf16[784,128], index: 1, kind: input, shape index: {}]
  %s2 = inlined_call_operand.vmem [shape: f32[1,128], index: 2, kind: input, shape index: {}]
  %s3 = inlined_call_operand.hbm [shape: bf16[128,128], index: 3, kind: input, shape index: {}]
  %s4 = inlined_call_operand.vmem [shape: f32[1,128], index: 4, kind: input, shape index: {}]
  %s5 = inlined_call_operand.hbm [shape: bf16[128,128], index: 5, kind: input, shape index: {}]
  %s6 = inlined_call_operand.vmem [shape: f32[1,128], index: 6, kind: input, shape index: {}]
  %s7 = inlined_call_operand.hbm [shape: bf16[128,128], index: 7, kind: input, shape index: {}]
  %s8 = inlined_call_operand.vmem [shape: f32[1,128], index: 8, kind: input, shape index: {}]
  %s9 = inlined_call_operand.hbm [shape: f32[16,128], index: 9, kind: output, shape index: {}]
  %s10 = sld [smem:[#allocation0]]
  $region89: #{tpu_custom_call.1} parent=0
    _
  %s12 = ssub.s32 1, %s10
  %s13 = scalar_select 0, %s12, %s10
  $region1: #{tpu_custom_call.1} parent=0
    #allocation2 [shape = 'u8[57344]{0}', space=vmem, size = 0xe000, scoped, tag = 'input window, operand 0']
    #allocation3 [shape = 's32[2]{0}', space=sflag, size = 0x8, scoped, tag = 'scoped memory for tpu_custom_call.1']
    #allocation4 [shape = 's32[2]{0}', space=sflag, size = 0x8, scoped, tag = 'scoped memory for tpu_custom_call.1']
    #allocation5 [shape = 'u8[200704]{0}', space=vmem, size = 0x31000, scoped, tag = 'input window, operand 1, single buffered']
    #allocation6 [shape = 's32[1]{0}', space=sflag, size = 0x4, scoped, tag = 'scoped memory for tpu_custom_call.1']
    #allocation7 [shape = 'u8[32768]{0}', space=vmem, size = 0x8000, scoped, tag = 'input window, operand 3, single buffered']
    #allocation8 [shape = 'u8[32768]{0}', space=vmem, size = 0x8000, scoped, tag = 'input window, operand 5, single buffered']
    #allocation9 [shape = 's32[1]{0}', space=sflag, size = 0x4, scoped, tag = 'scoped memory for tpu_custom_call.1']
    #allocation10 [shape = 'u8[32768]{0}', space=vmem, size = 0x8000, scoped, tag = 'input window, operand 7, single buffered']
    #allocation11 [shape = 'u8[8192]{0}', space=vmem, size = 0x2000, scoped, tag = 'output window, operand 0']
    %14 = vsyncpa [#allocation3], 0
    %s15 = scalar_lea.sflag [#allocation3], 1
    %16 = vsyncpa %s15, 0
    %17 = vsyncpa [#allocation6], 0
    %18 = vsyncpa [#allocation9], 0
    %19 = vsyncpa [#allocation4], 0
    %s20 = scalar_lea.sflag [#allocation4], 1
    %21 = vsyncpa %s20, 0
    loop: start=0, step=1, limit=4
    $region2: #{tpu_custom_call.1} parent=1 // loop_pre_header
      _
    $region3: #{tpu_custom_call.1} parent=1 // loop_header
      %s23 = sphi 0, %s27
      %p24 = scmp.ge.s32.totalorder %s23, 4
      %s33 = sphi 0, %s35
      %s36 = sphi 0, %s33
      %s37 = sphi 0, %s36
      %s53 = sphi 0, %s37
      %s57 = sphi 0, %s57
      %s59 = sphi 0, %s57
      %s60 = sphi 0, %s59
      %s74 = sphi 0, %s60
      %s78 = sphi 0, %s78
      %s80 = sphi 0, %s78
      %s81 = sphi 0, %s80
      %s95 = sphi 0, %s81
      %s99 = sphi 0, %s99
      %s101 = sphi 0, %s99
      %s102 = sphi 0, %s101
      %s116 = sphi 0, %s102
      %s120 = sphi 0, %s120
      %s122 = sphi 0, %s120
      %s123 = sphi 0, %s122
      %s137 = sphi 0, %s123
      %s141 = sphi 0, %s141
      %s143 = sphi 0, %s141
      %s144 = sphi 0, %s143
      %s158 = sphi 0, %s144
      %s162 = sphi 0, %s162
      %s164 = sphi 0, %s162
      %s165 = sphi 0, %s164
      %s179 = sphi 0, %s165
      %s183 = sphi 0, %s183
      %s185 = sphi 0, %s183
      %s186 = sphi 0, %s185
      %s200 = sphi 0, %s186
      %s204 = sphi 0, %s204
      %s206 = sphi 0, %s204
      %s207 = sphi 0, %s206
      %s221 = sphi 0, %s207
      %s227 = sphi 0, %s229
      %s230 = sphi 0, %s227
      %s231 = sphi 0, %s230
      %s247 = sphi 0, %s231
    $region4: #{tpu_custom_call.1} parent=1 // loop_header_branch
      %26 = sbr.rel (%p24) target = $region8
    $region5: #{tpu_custom_call.1} parent=1 // loop_body
      %s28 = ssub.s32 %s23, 1
      %s29 = ssub.s32 %s23, 2
      %s30 = sadd.s32 %s23, 1
      %s31 = ssub.s32 %s23, %s30
      %p32 = scmp.eq.s32.totalorder %s31, 0
      %s34 = sadd.s32 %s33, 1
      %s35 = scalar_select %p32, %s33, %s34
      %p38 = pneg %p32
      %p39 = scmp.eq.s32.totalorder %s23, 1
      %p40 = por %p38, %p39
      %p41 = scmp.ne.s32.totalorder %s33, %s36
      %p42 = scmp.eq.s32.totalorder %s23, 0
      %p43 = por %p41, %p42
      %p44 = scmp.ne.s32.totalorder %s33, %s36
      %p45 = scmp.eq.s32.totalorder %s28, 1
      %p46 = por %p44, %p45
      %p47 = scmp.ne.s32.totalorder %s36, %s37
      %p48 = scmp.eq.s32.totalorder %s28, 0
      %p49 = por %p47, %p48
      %p50 = scmp.ne.s32.totalorder %s36, %s37
      %p51 = scmp.eq.s32.totalorder %s29, 1
      %p52 = por %p50, %p51
      %p54 = scmp.ne.s32.totalorder %s37, %s53
      %p55 = scmp.eq.s32.totalorder %s29, 0
      %p56 = por %p54, %p55
      %s58 = sadd.s32 %s57, 1
      %p61 = scmp.eq.s32.totalorder %s23, 1
      %p62 = scmp.ne.s32.totalorder %s57, %s59
      %p63 = scmp.eq.s32.totalorder %s23, 0
      %p64 = por %p62, %p63
      %p65 = scmp.ne.s32.totalorder %s57, %s59
      %p66 = scmp.eq.s32.totalorder %s28, 1
      %p67 = por %p65, %p66
      %p68 = scmp.ne.s32.totalorder %s59, %s60
      %p69 = scmp.eq.s32.totalorder %s28, 0
      %p70 = por %p68, %p69
      %p71 = scmp.ne.s32.totalorder %s59, %s60
      %p72 = scmp.eq.s32.totalorder %s29, 1
      %p73 = por %p71, %p72
      %p75 = scmp.ne.s32.totalorder %s60, %s74
      %p76 = scmp.eq.s32.totalorder %s29, 0
      %p77 = por %p75, %p76
      %s79 = sadd.s32 %s78, 1
      %p82 = scmp.eq.s32.totalorder %s23, 1
      %p83 = scmp.ne.s32.totalorder %s78, %s80
      %p84 = scmp.eq.s32.totalorder %s23, 0
      %p85 = por %p83, %p84
      %p86 = scmp.ne.s32.totalorder %s78, %s80
      %p87 = scmp.eq.s32.totalorder %s28, 1
      %p88 = por %p86, %p87
      %p89 = scmp.ne.s32.totalorder %s80, %s81
      %p90 = scmp.eq.s32.totalorder %s28, 0
      %p91 = por %p89, %p90
      %p92 = scmp.ne.s32.totalorder %s80, %s81
      %p93 = scmp.eq.s32.totalorder %s29, 1
      %p94 = por %p92, %p93
      %p96 = scmp.ne.s32.totalorder %s81, %s95
      %p97 = scmp.eq.s32.totalorder %s29, 0
      %p98 = por %p96, %p97
      %s100 = sadd.s32 %s99, 1
      %p103 = scmp.eq.s32.totalorder %s23, 1
      %p104 = scmp.ne.s32.totalorder %s99, %s101
      %p105 = scmp.eq.s32.totalorder %s23, 0
      %p106 = por %p104, %p105
      %p107 = scmp.ne.s32.totalorder %s99, %s101
      %p108 = scmp.eq.s32.totalorder %s28, 1
      %p109 = por %p107, %p108
      %p110 = scmp.ne.s32.totalorder %s101, %s102
      %p111 = scmp.eq.s32.totalorder %s28, 0
      %p112 = por %p110, %p111
      %p113 = scmp.ne.s32.totalorder %s101, %s102
      %p114 = scmp.eq.s32.totalorder %s29, 1
      %p115 = por %p113, %p114
      %p117 = scmp.ne.s32.totalorder %s102, %s116
      %p118 = scmp.eq.s32.totalorder %s29, 0
      %p119 = por %p117, %p118
      %s121 = sadd.s32 %s120, 1
      %p124 = scmp.eq.s32.totalorder %s23, 1
      %p125 = scmp.ne.s32.totalorder %s120, %s122
      %p126 = scmp.eq.s32.totalorder %s23, 0
      %p127 = por %p125, %p126
      %p128 = scmp.ne.s32.totalorder %s120, %s122
      %p129 = scmp.eq.s32.totalorder %s28, 1
      %p130 = por %p128, %p129
      %p131 = scmp.ne.s32.totalorder %s122, %s123
      %p132 = scmp.eq.s32.totalorder %s28, 0
      %p133 = por %p131, %p132
      %p134 = scmp.ne.s32.totalorder %s122, %s123
      %p135 = scmp.eq.s32.totalorder %s29, 1
      %p136 = por %p134, %p135
      %p138 = scmp.ne.s32.totalorder %s123, %s137
      %p139 = scmp.eq.s32.totalorder %s29, 0
      %p140 = por %p138, %p139
      %s142 = sadd.s32 %s141, 1
      %p145 = scmp.eq.s32.totalorder %s23, 1
      %p146 = scmp.ne.s32.totalorder %s141, %s143
      %p147 = scmp.eq.s32.totalorder %s23, 0
      %p148 = por %p146, %p147
      %p149 = scmp.ne.s32.totalorder %s141, %s143
      %p150 = scmp.eq.s32.totalorder %s28, 1
      %p151 = por %p149, %p150
      %p152 = scmp.ne.s32.totalorder %s143, %s144
      %p153 = scmp.eq.s32.totalorder %s28, 0
      %p154 = por %p152, %p153
      %p155 = scmp.ne.s32.totalorder %s143, %s144
      %p156 = scmp.eq.s32.totalorder %s29, 1
      %p157 = por %p155, %p156
      %p159 = scmp.ne.s32.totalorder %s144, %s158
      %p160 = scmp.eq.s32.totalorder %s29, 0
      %p161 = por %p159, %p160
      %s163 = sadd.s32 %s162, 1
      %p166 = scmp.eq.s32.totalorder %s23, 1
      %p167 = scmp.ne.s32.totalorder %s162, %s164
      %p168 = scmp.eq.s32.totalorder %s23, 0
      %p169 = por %p167, %p168
      %p170 = scmp.ne.s32.totalorder %s162, %s164
      %p171 = scmp.eq.s32.totalorder %s28, 1
      %p172 = por %p170, %p171
      %p173 = scmp.ne.s32.totalorder %s164, %s165
      %p174 = scmp.eq.s32.totalorder %s28, 0
      %p175 = por %p173, %p174
      %p176 = scmp.ne.s32.totalorder %s164, %s165
      %p177 = scmp.eq.s32.totalorder %s29, 1
      %p178 = por %p176, %p177
      %p180 = scmp.ne.s32.totalorder %s165, %s179
      %p181 = scmp.eq.s32.totalorder %s29, 0
      %p182 = por %p180, %p181
      %s184 = sadd.s32 %s183, 1
      %p187 = scmp.eq.s32.totalorder %s23, 1
      %p188 = scmp.ne.s32.totalorder %s183, %s185
      %p189 = scmp.eq.s32.totalorder %s23, 0
      %p190 = por %p188, %p189
      %p191 = scmp.ne.s32.totalorder %s183, %s185
      %p192 = scmp.eq.s32.totalorder %s28, 1
      %p193 = por %p191, %p192
      %p194 = scmp.ne.s32.totalorder %s185, %s186
      %p195 = scmp.eq.s32.totalorder %s28, 0
      %p196 = por %p194, %p195
      %p197 = scmp.ne.s32.totalorder %s185, %s186
      %p198 = scmp.eq.s32.totalorder %s29, 1
      %p199 = por %p197, %p198
      %p201 = scmp.ne.s32.totalorder %s186, %s200
      %p202 = scmp.eq.s32.totalorder %s29, 0
      %p203 = por %p201, %p202
      %s205 = sadd.s32 %s204, 1
      %p208 = scmp.eq.s32.totalorder %s23, 1
      %p209 = scmp.ne.s32.totalorder %s204, %s206
      %p210 = scmp.eq.s32.totalorder %s23, 0
      %p211 = por %p209, %p210
      %p212 = scmp.ne.s32.totalorder %s204, %s206
      %p213 = scmp.eq.s32.totalorder %s28, 1
      %p214 = por %p212, %p213
      %p215 = scmp.ne.s32.totalorder %s206, %s207
      %p216 = scmp.eq.s32.totalorder %s28, 0
      %p217 = por %p215, %p216
      %p218 = scmp.ne.s32.totalorder %s206, %s207
      %p219 = scmp.eq.s32.totalorder %s29, 1
      %p220 = por %p218, %p219
      %p222 = scmp.ne.s32.totalorder %s207, %s221
      %p223 = scmp.eq.s32.totalorder %s29, 0
      %p224 = por %p222, %p223
      %s225 = ssub.s32 %s23, %s30
      %p226 = scmp.eq.s32.totalorder %s225, 0
      %s228 = sadd.s32 %s227, 1
      %s229 = scalar_select %p226, %s227, %s228
      %p232 = pneg %p226
      %p233 = scmp.eq.s32.totalorder %s23, 1
      %p234 = por %p232, %p233
      %p235 = scmp.ne.s32.totalorder %s227, %s230
      %p236 = scmp.eq.s32.totalorder %s23, 0
      %p237 = por %p235, %p236
      %p238 = scmp.ne.s32.totalorder %s227, %s230
      %p239 = scmp.eq.s32.totalorder %s28, 1
      %p240 = por %p238, %p239
      %p241 = scmp.ne.s32.totalorder %s230, %s231
      %p242 = scmp.eq.s32.totalorder %s28, 0
      %p243 = por %p241, %p242
      %p244 = scmp.ne.s32.totalorder %s230, %s231
      %p245 = scmp.eq.s32.totalorder %s29, 1
      %p246 = por %p244, %p245
      %p248 = scmp.ne.s32.totalorder %s231, %s247
      %p249 = scmp.eq.s32.totalorder %s29, 0
      %p250 = por %p248, %p249
      %p251 = scmp.le.s32.totalorder 1, %s23
      %p252 = scmp.lt.s32.totalorder %s23, 3
      %p253 = pnand %p251, %p252
      %p254 = pneg %p253
      // Predicated region
      $region9: #{tpu_custom_call.1} parent=5 // pred_check
        _
      $region10: #{tpu_custom_call.1} parent=5 // pred_check_branch
        %256 = sbr.rel (%p253) target = $region12
      $region11: #{tpu_custom_call.1} parent=5 // pred_region
        %s257 = ssub.s32 %s23, 1
        // Predicated region
        $region13: #{tpu_custom_call.1} parent=11 // pred_check
          %p258 = pneg %p70
        $region14: #{tpu_custom_call.1} parent=11 // pred_check_branch
          %260 = sbr.rel (%p258) target = $region16
        $region15: #{tpu_custom_call.1} parent=11 // pred_region
          %262 = vsyncadd [#allocation6], 0
          %s263 = sshll.u32 %s1, 4
          %s264 = int_to_ptr.hbm [resolvable:$true] %s263
          %s265 = sshll.u32 [#allocation5], 4
          %s266 = int_to_ptr.vmem [resolvable:$true] %s265
          %271 = dma.hbm_to_vmem [thread:$0]  %s264, 6272, %s266, [#allocation6], 64, 64, 4
        $region16: #{tpu_custom_call.1} parent=11 // pred_fallthru
          _
        // Predicated region
        $region17: #{tpu_custom_call.1} parent=11 // pred_check
          %p272 = pneg %p91
        $region18: #{tpu_custom_call.1} parent=11 // pred_check_branch
          %274 = sbr.rel (%p272) target = $region20
        $region19: #{tpu_custom_call.1} parent=11 // pred_region
          _
        $region20: #{tpu_custom_call.1} parent=11 // pred_fallthru
          _
        // Predicated region
        $region21: #{tpu_custom_call.1} parent=11 // pred_check
          %p275 = pneg %p112
        $region22: #{tpu_custom_call.1} parent=11 // pred_check_branch
          %277 = sbr.rel (%p275) target = $region24
        $region23: #{tpu_custom_call.1} parent=11 // pred_region
          %279 = vsyncadd [#allocation6], 0
          %s280 = sshll.u32 %s3, 4
          %s281 = int_to_ptr.hbm [resolvable:$true] %s280
          %s282 = sshll.u32 [#allocation7], 4
          %s283 = int_to_ptr.vmem [resolvable:$true] %s282
          %288 = dma.hbm_to_vmem [thread:$0]  %s281, 1024, %s283, [#allocation6], 64, 64, 4
        $region24: #{tpu_custom_call.1} parent=11 // pred_fallthru
          _
        // Predicated region
        $region25: #{tpu_custom_call.1} parent=11 // pred_check
          %p289 = pneg %p133
        $region26: #{tpu_custom_call.1} parent=11 // pred_check_branch
          %291 = sbr.rel (%p289) target = $region28
        $region27: #{tpu_custom_call.1} parent=11 // pred_region
          _
        $region28: #{tpu_custom_call.1} parent=11 // pred_fallthru
          _
        // Predicated region
        $region29: #{tpu_custom_call.1} parent=11 // pred_check
          %p292 = pneg %p154
        $region30: #{tpu_custom_call.1} parent=11 // pred_check_branch
          %294 = sbr.rel (%p292) target = $region32
        $region31: #{tpu_custom_call.1} parent=11 // pred_region
          %296 = vsyncadd [#allocation9], 0
          %s297 = sshll.u32 %s5, 4
          %s298 = int_to_ptr.hbm [resolvable:$true] %s297
          %s299 = sshll.u32 [#allocation8], 4
          %s300 = int_to_ptr.vmem [resolvable:$true] %s299
          %305 = dma.hbm_to_vmem [thread:$0]  %s298, 1024, %s300, [#allocation9], 64, 64, 4
        $region32: #{tpu_custom_call.1} parent=11 // pred_fallthru
          _
        // Predicated region
        $region33: #{tpu_custom_call.1} parent=11 // pred_check
          %p306 = pneg %p175
        $region34: #{tpu_custom_call.1} parent=11 // pred_check_branch
          %308 = sbr.rel (%p306) target = $region36
        $region35: #{tpu_custom_call.1} parent=11 // pred_region
          _
        $region36: #{tpu_custom_call.1} parent=11 // pred_fallthru
          _
        // Predicated region
        $region37: #{tpu_custom_call.1} parent=11 // pred_check
          %p309 = pneg %p196
        $region38: #{tpu_custom_call.1} parent=11 // pred_check_branch
          %311 = sbr.rel (%p309) target = $region40
        $region39: #{tpu_custom_call.1} parent=11 // pred_region
          %313 = vsyncadd [#allocation9], 0
          %s314 = sshll.u32 %s7, 4
          %s315 = int_to_ptr.hbm [resolvable:$true] %s314
          %s316 = sshll.u32 [#allocation10], 4
          %s317 = int_to_ptr.vmem [resolvable:$true] %s316
          %322 = dma.hbm_to_vmem [thread:$0]  %s315, 1024, %s317, [#allocation9], 64, 64, 4
        $region40: #{tpu_custom_call.1} parent=11 // pred_fallthru
          _
        // Predicated region
        $region41: #{tpu_custom_call.1} parent=11 // pred_check
          %p323 = pneg %p217
        $region42: #{tpu_custom_call.1} parent=11 // pred_check_branch
          %325 = sbr.rel (%p323) target = $region44
        $region43: #{tpu_custom_call.1} parent=11 // pred_region
          _
        $region44: #{tpu_custom_call.1} parent=11 // pred_fallthru
          _
      $region12: #{tpu_custom_call.1} parent=5 // pred_fallthru
        _
      %p326 = scmp.lt.s32.totalorder %s23, 2
      // Predicated region
      $region45: #{tpu_custom_call.1} parent=5 // pred_check
        %p327 = pneg %p326
      $region46: #{tpu_custom_call.1} parent=5 // pred_check_branch
        %329 = sbr.rel (%p327) target = $region48
      $region47: #{tpu_custom_call.1} parent=5 // pred_region
        // Predicated region
        $region49: #{tpu_custom_call.1} parent=47 // pred_check
          %p330 = pneg %p43
        $region50: #{tpu_custom_call.1} parent=47 // pred_check_branch
          %332 = sbr.rel (%p330) target = $region52
        $region51: #{tpu_custom_call.1} parent=47 // pred_region
          %s333 = sand.u32 %s33, 1
          %s334 = scalar_lea.sflag [#allocation3], %s333
          %s335 = sand.u32 %s33, 1
          %s336 = smul.addr %s335, 56
          %s337 = scalar_lea.vmem [#allocation2], %s336
          %339 = vsyncadd %s334, 0
          %s340 = smul.addr %s23, 7
          %s341 = smul.addr %s340, 8
          %s342 = scalar_lea.hbm %s0, %s341
          %s344 = sshll.u32 %s342, 4
          %s345 = int_to_ptr.hbm [resolvable:$true] %s344
          %s346 = sshll.u32 %s337, 4
          %s347 = int_to_ptr.vmem [resolvable:$true] %s346
          %349 = dma.hbm_to_vmem [thread:$0]  %s345, 896, %s347, %s334
        $region52: #{tpu_custom_call.1} parent=47 // pred_fallthru
          _
      $region48: #{tpu_custom_call.1} parent=5 // pred_fallthru
        _
      %p350 = scmp.le.s32.totalorder 1, %s23
      %p351 = scmp.lt.s32.totalorder %s23, 3
      %p352 = pnand %p350, %p351
      %p353 = pneg %p352
      // Predicated region
      $region53: #{tpu_custom_call.1} parent=5 // pred_check
        _
      $region54: #{tpu_custom_call.1} parent=5 // pred_check_branch
        %355 = sbr.rel (%p352) target = $region56
      $region55: #{tpu_custom_call.1} parent=5 // pred_region
        %s356 = ssub.s32 %s23, 1
        %s357 = sand.u32 %s36, 1
        %s358 = scalar_lea.sflag [#allocation3], %s357
        %s359 = sand.u32 %s36, 1
        %s360 = smul.addr %s359, 56
        %s361 = scalar_lea.vmem [#allocation2], %s360
        // Predicated region
        $region57: #{tpu_custom_call.1} parent=55 // pred_check
          %p362 = pneg %p49
        $region58: #{tpu_custom_call.1} parent=55 // pred_check_branch
          %364 = sbr.rel (%p362) target = $region60
        $region59: #{tpu_custom_call.1} parent=55 // pred_region
          %366 = dma.done %s358, 896
        $region60: #{tpu_custom_call.1} parent=55 // pred_fallthru
          _
        // Predicated region
        $region61: #{tpu_custom_call.1} parent=55 // pred_check
          %p367 = pneg %p70
        $region62: #{tpu_custom_call.1} parent=55 // pred_check_branch
          %369 = sbr.rel (%p367) target = $region64
        $region63: #{tpu_custom_call.1} parent=55 // pred_region
          %371 = dma.done [#allocation6], 6272
        $region64: #{tpu_custom_call.1} parent=55 // pred_fallthru
          _
        // Predicated region
        $region65: #{tpu_custom_call.1} parent=55 // pred_check
          %p372 = pneg %p112
        $region66: #{tpu_custom_call.1} parent=55 // pred_check_branch
          %374 = sbr.rel (%p372) target = $region68
        $region67: #{tpu_custom_call.1} parent=55 // pred_region
          %376 = dma.done [#allocation6], 1024
        $region68: #{tpu_custom_call.1} parent=55 // pred_fallthru
          _
        // Predicated region
        $region69: #{tpu_custom_call.1} parent=55 // pred_check
          %p377 = pneg %p154
        $region70: #{tpu_custom_call.1} parent=55 // pred_check_branch
          %379 = sbr.rel (%p377) target = $region72
        $region71: #{tpu_custom_call.1} parent=55 // pred_region
          %381 = dma.done [#allocation9], 1024
        $region72: #{tpu_custom_call.1} parent=55 // pred_fallthru
          _
        // Predicated region
        $region73: #{tpu_custom_call.1} parent=55 // pred_check
          %p382 = pneg %p196
        $region74: #{tpu_custom_call.1} parent=55 // pred_check_branch
          %384 = sbr.rel (%p382) target = $region76
        $region75: #{tpu_custom_call.1} parent=55 // pred_region
          %386 = dma.done [#allocation9], 1024
        $region76: #{tpu_custom_call.1} parent=55 // pred_fallthru
          _
        %s387 = sand.u32 %s36, 1
        %s388 = scalar_lea.sflag [#allocation3], %s387
        %s389 = sand.u32 %s36, 1
        %s390 = smul.addr %s389, 56
        %s391 = scalar_lea.vmem [#allocation2], %s390
        %p392 = pneg %p49
        %p393 = pneg %p46
        %p394 = pneg %p70
        %p395 = pneg %p67
        %p396 = pneg %p91
        %p397 = pneg %p88
        %p398 = pneg %p112
        %p399 = pneg %p109
        %p400 = pneg %p133
        %p401 = pneg %p130
        %p402 = pneg %p154
        %p403 = pneg %p151
        %p404 = pneg %p175
        %p405 = pneg %p172
        %p406 = pneg %p196
        %p407 = pneg %p193
        %p408 = pneg %p217
        %p409 = pneg %p214
        %p410 = pneg %p243
        %p411 = pneg %p240
        %s412 = sand.u32 %s230, 1
        %s413 = scalar_lea.sflag [#allocation4], %s412
        %s414 = sand.u32 %s230, 1
        %s415 = smul.addr %s414, 8
        %s416 = scalar_lea.vmem [#allocation11], %s415
        %v418 = vld [vmem:[%s361] sm:$0xff]
        %v419 = vld [vmem:[%s361 + $0x8] sm:$0xff]
        %v420 = vld [vmem:[%s361 + $0x10] sm:$0xff]
        %v421 = vld [vmem:[%s361 + $0x18] sm:$0xff]
        %v422 = vld [vmem:[%s361 + $0x20] sm:$0xff]
        %v423 = vld [vmem:[%s361 + $0x28] sm:$0xff]
        %v424 = vld [vmem:[%s361 + $0x30] sm:$0xff]
        %v425 = vpack.c.bf16 %v418, %v418
        %v426 = vpack.c.bf16 %v419, %v419
        %v427 = vpack.c.bf16 %v420, %v420
        %v428 = vpack.c.bf16 %v421, %v421
        %v429 = vpack.c.bf16 %v422, %v422
        %v430 = vpack.c.bf16 %v423, %v423
        %v431 = vpack.c.bf16 %v424, %v424
        %v432 = vld [vmem:[#allocation5] sm:$0xf]
        %v433 = vld [vmem:[#allocation5 + $0x4] sm:$0xf]
        %v434 = vld [vmem:[#allocation5 + $0x8] sm:$0xf]
        %v435 = vld [vmem:[#allocation5 + $0xc] sm:$0xf]
        %v436 = vld [vmem:[#allocation5 + $0x10] sm:$0xf]
        %v437 = vld [vmem:[#allocation5 + $0x14] sm:$0xf]
        %v438 = vld [vmem:[#allocation5 + $0x18] sm:$0xf]
        %v439 = vld [vmem:[#allocation5 + $0x1c] sm:$0xf]
        %v440 = vld [vmem:[#allocation5 + $0x20] sm:$0xf]
        %v441 = vld [vmem:[#allocation5 + $0x24] sm:$0xf]
        %v442 = vld [vmem:[#allocation5 + $0x28] sm:$0xf]
        %v443 = vld [vmem:[#allocation5 + $0x2c] sm:$0xf]
        %v444 = vld [vmem:[#allocation5 + $0x30] sm:$0xf]
        %v445 = vld [vmem:[#allocation5 + $0x34] sm:$0xf]
        %v446 = vld [vmem:[#allocation5 + $0x38] sm:$0xf]
        %v447 = vld [vmem:[#allocation5 + $0x3c] sm:$0xf]
        %v448 = vld [vmem:[#allocation5 + $0x40] sm:$0xf]
        %v449 = vld [vmem:[#allocation5 + $0x44] sm:$0xf]
        %v450 = vld [vmem:[#allocation5 + $0x48] sm:$0xf]
        %v451 = vld [vmem:[#allocation5 + $0x4c] sm:$0xf]
        %v452 = vld [vmem:[#allocation5 + $0x50] sm:$0xf]
        %v453 = vld [vmem:[#allocation5 + $0x54] sm:$0xf]
        %v454 = vld [vmem:[#allocation5 + $0x58] sm:$0xf]
        %v455 = vld [vmem:[#allocation5 + $0x5c] sm:$0xf]
        %v456 = vld [vmem:[#allocation5 + $0x60] sm:$0xf]
        %v457 = vld [vmem:[#allocation5 + $0x64] sm:$0xf]
        %v458 = vld [vmem:[#allocation5 + $0x68] sm:$0xf]
        %v459 = vld [vmem:[#allocation5 + $0x6c] sm:$0xf]
        %v460 = vld [vmem:[#allocation5 + $0x70] sm:$0xf]
        %v461 = vld [vmem:[#allocation5 + $0x74] sm:$0xf]
        %v462 = vld [vmem:[#allocation5 + $0x78] sm:$0xf]
        %v463 = vld [vmem:[#allocation5 + $0x7c] sm:$0xf]
        %v464 = vld [vmem:[#allocation5 + $0x80] sm:$0xf]
        %v465 = vld [vmem:[#allocation5 + $0x84] sm:$0xf]
        %v466 = vld [vmem:[#allocation5 + $0x88] sm:$0xf]
        %v467 = vld [vmem:[#allocation5 + $0x8c] sm:$0xf]
        %v468 = vld [vmem:[#allocation5 + $0x90] sm:$0xf]
        %v469 = vld [vmem:[#allocation5 + $0x94] sm:$0xf]
        %v470 = vld [vmem:[#allocation5 + $0x98] sm:$0xf]
        %v471 = vld [vmem:[#allocation5 + $0x9c] sm:$0xf]
        %v472 = vld [vmem:[#allocation5 + $0xa0] sm:$0xf]
        %v473 = vld [vmem:[#allocation5 + $0xa4] sm:$0xf]
        %v474 = vld [vmem:[#allocation5 + $0xa8] sm:$0xf]
        %v475 = vld [vmem:[#allocation5 + $0xac] sm:$0xf]
        %v476 = vld [vmem:[#allocation5 + $0xb0] sm:$0xf]
        %v477 = vld [vmem:[#allocation5 + $0xb4] sm:$0xf]
        %v478 = vld [vmem:[#allocation5 + $0xb8] sm:$0xf]
        %v479 = vld [vmem:[#allocation5 + $0xbc] sm:$0xf]
        %v480 = vld [vmem:[#allocation5 + $0xc0] sm:$0xf]
        %v481 = vld [vmem:[#allocation5 + $0xc4] sm:$0xf]
        %v482 = vld [vmem:[#allocation5 + $0xc8] sm:$0xf]
        %v483 = vld [vmem:[#allocation5 + $0xcc] sm:$0xf]
        %v484 = vld [vmem:[#allocation5 + $0xd0] sm:$0xf]
        %v485 = vld [vmem:[#allocation5 + $0xd4] sm:$0xf]
        %v486 = vld [vmem:[#allocation5 + $0xd8] sm:$0xf]
        %v487 = vld [vmem:[#allocation5 + $0xdc] sm:$0xf]
        %v488 = vld [vmem:[#allocation5 + $0xe0] sm:$0xf]
        %v489 = vld [vmem:[#allocation5 + $0xe4] sm:$0xf]
        %v490 = vld [vmem:[#allocation5 + $0xe8] sm:$0xf]
        %v491 = vld [vmem:[#allocation5 + $0xec] sm:$0xf]
        %v492 = vld [vmem:[#allocation5 + $0xf0] sm:$0xf]
        %v493 = vld [vmem:[#allocation5 + $0xf4] sm:$0xf]
        %v494 = vld [vmem:[#allocation5 + $0xf8] sm:$0xf]
        %v495 = vld [vmem:[#allocation5 + $0xfc] sm:$0xf]
        %v496 = vld [vmem:[#allocation5 + $0x100] sm:$0xf]
        %v497 = vld [vmem:[#allocation5 + $0x104] sm:$0xf]
        %v498 = vld [vmem:[#allocation5 + $0x108] sm:$0xf]
        %v499 = vld [vmem:[#allocation5 + $0x10c] sm:$0xf]
        %v500 = vld [vmem:[#allocation5 + $0x110] sm:$0xf]
        %v501 = vld [vmem:[#allocation5 + $0x114] sm:$0xf]
        %v502 = vld [vmem:[#allocation5 + $0x118] sm:$0xf]
        %v503 = vld [vmem:[#allocation5 + $0x11c] sm:$0xf]
        %v504 = vld [vmem:[#allocation5 + $0x120] sm:$0xf]
        %v505 = vld [vmem:[#allocation5 + $0x124] sm:$0xf]
        %v506 = vld [vmem:[#allocation5 + $0x128] sm:$0xf]
        %v507 = vld [vmem:[#allocation5 + $0x12c] sm:$0xf]
        %v508 = vld [vmem:[#allocation5 + $0x130] sm:$0xf]
        %v509 = vld [vmem:[#allocation5 + $0x134] sm:$0xf]
        %v510 = vld [vmem:[#allocation5 + $0x138] sm:$0xf]
        %v511 = vld [vmem:[#allocation5 + $0x13c] sm:$0xf]
        %v512 = vld [vmem:[#allocation5 + $0x140] sm:$0xf]
        %v513 = vld [vmem:[#allocation5 + $0x144] sm:$0xf]
        %v514 = vld [vmem:[#allocation5 + $0x148] sm:$0xf]
        %v515 = vld [vmem:[#allocation5 + $0x14c] sm:$0xf]
        %v516 = vld [vmem:[#allocation5 + $0x150] sm:$0xf]
        %v517 = vld [vmem:[#allocation5 + $0x154] sm:$0xf]
        %v518 = vld [vmem:[#allocation5 + $0x158] sm:$0xf]
        %v519 = vld [vmem:[#allocation5 + $0x15c] sm:$0xf]
        %v520 = vld [vmem:[#allocation5 + $0x160] sm:$0xf]
        %v521 = vld [vmem:[#allocation5 + $0x164] sm:$0xf]
        %v522 = vld [vmem:[#allocation5 + $0x168] sm:$0xf]
        %v523 = vld [vmem:[#allocation5 + $0x16c] sm:$0xf]
        %v524 = vld [vmem:[#allocation5 + $0x170] sm:$0xf]
        %v525 = vld [vmem:[#allocation5 + $0x174] sm:$0xf]
        %v526 = vld [vmem:[#allocation5 + $0x178] sm:$0xf]
        %v527 = vld [vmem:[#allocation5 + $0x17c] sm:$0xf]
        %v528 = vld [vmem:[#allocation5 + $0x180] sm:$0xf]
        %v529 = vld [vmem:[#allocation5 + $0x184] sm:$0xf]
        %v530 = vld [vmem:[%s2] sm:$0x1]
        %v532 = vperm.slane %v530, 0
        %v632 = vunpack.c.l.b16 %v432
        %v633 = vunpack.c.l.b16 %v433
        %v634 = vunpack.c.l.b16 %v434
        %v635 = vunpack.c.l.b16 %v435
        %v636 = vunpack.c.l.b16 %v436
        %v637 = vunpack.c.l.b16 %v437
        %v638 = vunpack.c.l.b16 %v438
        %v639 = vunpack.c.l.b16 %v439
        %v640 = vunpack.c.l.b16 %v440
        %v641 = vunpack.c.l.b16 %v441
        %v642 = vunpack.c.l.b16 %v442
        %v643 = vunpack.c.l.b16 %v443
        %v644 = vunpack.c.l.b16 %v444
        %v645 = vunpack.c.l.b16 %v445
        %v646 = vunpack.c.l.b16 %v446
        %v647 = vunpack.c.l.b16 %v447
        %v648 = vunpack.c.l.b16 %v448
        %v649 = vunpack.c.l.b16 %v449
        %v650 = vunpack.c.l.b16 %v450
        %v651 = vunpack.c.l.b16 %v451
        %v652 = vunpack.c.l.b16 %v452
        %v653 = vunpack.c.l.b16 %v453
        %v654 = vunpack.c.l.b16 %v454
        %v655 = vunpack.c.l.b16 %v455
        %v656 = vunpack.c.l.b16 %v456
        %v657 = vunpack.c.l.b16 %v457
        %v658 = vunpack.c.l.b16 %v458
        %v659 = vunpack.c.l.b16 %v459
        %v660 = vunpack.c.l.b16 %v460
        %v661 = vunpack.c.l.b16 %v461
        %v662 = vunpack.c.l.b16 %v462
        %v663 = vunpack.c.l.b16 %v463
        %v664 = vunpack.c.l.b16 %v464
        %v665 = vunpack.c.l.b16 %v465
        %v666 = vunpack.c.l.b16 %v466
        %v667 = vunpack.c.l.b16 %v467
        %v668 = vunpack.c.l.b16 %v468
        %v669 = vunpack.c.l.b16 %v469
        %v670 = vunpack.c.l.b16 %v470
        %v671 = vunpack.c.l.b16 %v471
        %v672 = vunpack.c.l.b16 %v472
        %v673 = vunpack.c.l.b16 %v473
        %v674 = vunpack.c.l.b16 %v474
        %v675 = vunpack.c.l.b16 %v475
        %v676 = vunpack.c.l.b16 %v476
        %v677 = vunpack.c.l.b16 %v477
        %v678 = vunpack.c.l.b16 %v478
        %v679 = vunpack.c.l.b16 %v479
        %v680 = vunpack.c.l.b16 %v480
        %v681 = vunpack.c.l.b16 %v481
        %v682 = vunpack.c.l.b16 %v482
        %v683 = vunpack.c.l.b16 %v483
        %v684 = vunpack.c.l.b16 %v484
        %v685 = vunpack.c.l.b16 %v485
        %v686 = vunpack.c.l.b16 %v486
        %v687 = vunpack.c.l.b16 %v487
        %v688 = vunpack.c.l.b16 %v488
        %v689 = vunpack.c.l.b16 %v489
        %v690 = vunpack.c.l.b16 %v490
        %v691 = vunpack.c.l.b16 %v491
        %v692 = vunpack.c.l.b16 %v492
        %v693 = vunpack.c.l.b16 %v493
        %v694 = vunpack.c.l.b16 %v494
        %v695 = vunpack.c.l.b16 %v495
        %v696 = vunpack.c.l.b16 %v496
        %v697 = vunpack.c.l.b16 %v497
        %v698 = vunpack.c.l.b16 %v498
        %v699 = vunpack.c.l.b16 %v499
        %v700 = vunpack.c.l.b16 %v500
        %v701 = vunpack.c.l.b16 %v501
        %v702 = vunpack.c.l.b16 %v502
        %v703 = vunpack.c.l.b16 %v503
        %v704 = vunpack.c.l.b16 %v504
        %v705 = vunpack.c.l.b16 %v505
        %v706 = vunpack.c.l.b16 %v506
        %v707 = vunpack.c.l.b16 %v507
        %v708 = vunpack.c.l.b16 %v508
        %v709 = vunpack.c.l.b16 %v509
        %v710 = vunpack.c.l.b16 %v510
        %v711 = vunpack.c.l.b16 %v511
        %v712 = vunpack.c.l.b16 %v512
        %v713 = vunpack.c.l.b16 %v513
        %v714 = vunpack.c.l.b16 %v514
        %v715 = vunpack.c.l.b16 %v515
        %v716 = vunpack.c.l.b16 %v516
        %v717 = vunpack.c.l.b16 %v517
        %v718 = vunpack.c.l.b16 %v518
        %v719 = vunpack.c.l.b16 %v519
        %v720 = vunpack.c.l.b16 %v520
        %v721 = vunpack.c.l.b16 %v521
        %v722 = vunpack.c.l.b16 %v522
        %v723 = vunpack.c.l.b16 %v523
        %v724 = vunpack.c.l.b16 %v524
        %v725 = vunpack.c.l.b16 %v525
        %v726 = vunpack.c.l.b16 %v526
        %v727 = vunpack.c.l.b16 %v527
        %v728 = vunpack.c.l.b16 %v528
        %v729 = vunpack.c.l.b16 %v529
        %v730 = vpack.c.b16 %v633, %v632
        %v731 = vpack.c.b16 %v635, %v634
        %v732 = vpack.c.b16 %v637, %v636
        %v733 = vpack.c.b16 %v639, %v638
        %v734 = vpack.c.b16 %v641, %v640
        %v735 = vpack.c.b16 %v643, %v642
        %v736 = vpack.c.b16 %v645, %v644
        %v737 = vpack.c.b16 %v647, %v646
        %v738 = vpack.c.b16 %v649, %v648
        %v739 = vpack.c.b16 %v651, %v650
        %v740 = vpack.c.b16 %v653, %v652
        %v741 = vpack.c.b16 %v655, %v654
        %v742 = vpack.c.b16 %v657, %v656
        %v743 = vpack.c.b16 %v659, %v658
        %v744 = vpack.c.b16 %v661, %v660
        %v745 = vpack.c.b16 %v663, %v662
        %v746 = vpack.c.b16 %v665, %v664
        %v747 = vpack.c.b16 %v667, %v666
        %v748 = vpack.c.b16 %v669, %v668
        %v749 = vpack.c.b16 %v671, %v670
        %v750 = vpack.c.b16 %v673, %v672
        %v751 = vpack.c.b16 %v675, %v674
        %v752 = vpack.c.b16 %v677, %v676
        %v753 = vpack.c.b16 %v679, %v678
        %v754 = vpack.c.b16 %v681, %v680
        %v755 = vpack.c.b16 %v683, %v682
        %v756 = vpack.c.b16 %v685, %v684
        %v757 = vpack.c.b16 %v687, %v686
        %v758 = vpack.c.b16 %v689, %v688
        %v759 = vpack.c.b16 %v691, %v690
        %v760 = vpack.c.b16 %v693, %v692
        %v761 = vpack.c.b16 %v695, %v694
        %v762 = vpack.c.b16 %v697, %v696
        %v763 = vpack.c.b16 %v699, %v698
        %v764 = vpack.c.b16 %v701, %v700
        %v765 = vpack.c.b16 %v703, %v702
        %v766 = vpack.c.b16 %v705, %v704
        %v767 = vpack.c.b16 %v707, %v706
        %v768 = vpack.c.b16 %v709, %v708
        %v769 = vpack.c.b16 %v711, %v710
        %v770 = vpack.c.b16 %v713, %v712
        %v771 = vpack.c.b16 %v715, %v714
        %v772 = vpack.c.b16 %v717, %v716
        %v773 = vpack.c.b16 %v719, %v718
        %v774 = vpack.c.b16 %v721, %v720
        %v775 = vpack.c.b16 %v723, %v722
        %v776 = vpack.c.b16 %v725, %v724
        %v777 = vpack.c.b16 %v727, %v726
        %v778 = vpack.c.b16 %v729, %v728
        %vm828 = vcmask 130048
        %v830 = vsel %vm828, %v431, 0
        %832 = vmatpush.bf16.msra.mxu0 %v737
        %833 = vmatpush.bf16.msra.mxu0 %v736
        %834 = vmatpush.bf16.msra.mxu0 %v735
        %835 = vmatpush.bf16.msra.mxu0 %v734
        %836 = vmatpush.bf16.msra.mxu0 %v733
        %837 = vmatpush.bf16.msra.mxu0 %v732
        %838 = vmatpush.bf16.msra.mxu0 %v731
        %839 = vmatpush.bf16.msra.mxu0 %v730
        %840 = vmatmul.bf16.gmra.mxu0 %v425
        %v841 = vpop.f32.mrf.mxu0
        %v842 = vadd.f32 %v532, %v841
        %v843 = vpop.f32.mrf.mxu0
        %844 = vdwg.mxu0
        %845 = vmatpush.bf16.msra.mxu0 %v745
        %846 = vmatpush.bf16.msra.mxu0 %v744
        %847 = vmatpush.bf16.msra.mxu0 %v743
        %848 = vmatpush.bf16.msra.mxu0 %v742
        %849 = vmatpush.bf16.msra.mxu0 %v741
        %850 = vmatpush.bf16.msra.mxu0 %v740
        %851 = vmatpush.bf16.msra.mxu0 %v739
        %852 = vmatpush.bf16.msra.mxu0 %v738
        %853 = vmatmul.bf16.gmra.mxu0 %v426
        %v854 = vpop.f32.mrf.mxu0
        %v855 = vadd.f32 %v842, %v854
        %v856 = vpop.f32.mrf.mxu0
        %857 = vdwg.mxu0
        %858 = vmatpush.bf16.msra.mxu0 %v753
        %859 = vmatpush.bf16.msra.mxu0 %v752
        %860 = vmatpush.bf16.msra.mxu0 %v751
        %861 = vmatpush.bf16.msra.mxu0 %v750
        %862 = vmatpush.bf16.msra.mxu0 %v749
        %863 = vmatpush.bf16.msra.mxu0 %v748
        %864 = vmatpush.bf16.msra.mxu0 %v747
        %865 = vmatpush.bf16.msra.mxu0 %v746
        %866 = vmatmul.bf16.gmra.mxu0 %v427
        %v867 = vpop.f32.mrf.mxu0
        %v868 = vadd.f32 %v855, %v867
        %v869 = vpop.f32.mrf.mxu0
        %870 = vdwg.mxu0
        %871 = vmatpush.bf16.msra.mxu0 %v761
        %872 = vmatpush.bf16.msra.mxu0 %v760
        %873 = vmatpush.bf16.msra.mxu0 %v759
        %874 = vmatpush.bf16.msra.mxu0 %v758
        %875 = vmatpush.bf16.msra.mxu0 %v757
        %876 = vmatpush.bf16.msra.mxu0 %v756
        %877 = vmatpush.bf16.msra.mxu0 %v755
        %878 = vmatpush.bf16.msra.mxu0 %v754
        %879 = vmatmul.bf16.gmra.mxu0 %v428
        %v880 = vpop.f32.mrf.mxu0
        %v881 = vadd.f32 %v868, %v880
        %v882 = vpop.f32.mrf.mxu0
        %883 = vdwg.mxu0
        %884 = vmatpush.bf16.msra.mxu0 %v769
        %885 = vmatpush.bf16.msra.mxu0 %v768
        %886 = vmatpush.bf16.msra.mxu0 %v767
        %887 = vmatpush.bf16.msra.mxu0 %v766
        %888 = vmatpush.bf16.msra.mxu0 %v765
        %889 = vmatpush.bf16.msra.mxu0 %v764
        %890 = vmatpush.bf16.msra.mxu0 %v763
        %891 = vmatpush.bf16.msra.mxu0 %v762
        %892 = vmatmul.bf16.gmra.mxu0 %v429
        %v893 = vpop.f32.mrf.mxu0
        %v894 = vadd.f32 %v881, %v893
        %v895 = vpop.f32.mrf.mxu0
        %896 = vdwg.mxu0
        %897 = vmatpush.bf16.msra.mxu0 %v777
        %898 = vmatpush.bf16.msra.mxu0 %v776
        %899 = vmatpush.bf16.msra.mxu0 %v775
        %900 = vmatpush.bf16.msra.mxu0 %v774
        %901 = vmatpush.bf16.msra.mxu0 %v773
        %902 = vmatpush.bf16.msra.mxu0 %v772
        %903 = vmatpush.bf16.msra.mxu0 %v771
        %904 = vmatpush.bf16.msra.mxu0 %v770
        %905 = vmatmul.bf16.gmra.mxu0 %v430
        %v906 = vpop.f32.mrf.mxu0
        %v907 = vadd.f32 %v894, %v906
        %v908 = vpop.f32.mrf.mxu0
        %909 = vdwg.mxu0
        %910 = vmatpush.bf16.msra.mxu0 0
        %911 = vmatpush.bf16.msra.mxu0 0
        %912 = vmatpush.bf16.msra.mxu0 0
        %913 = vmatpush.bf16.msra.mxu0 0
        %914 = vmatpush.bf16.msra.mxu0 0
        %915 = vmatpush.bf16.msra.mxu0 0
        %916 = vmatpush.bf16.msra.mxu0 0
        %917 = vmatpush.bf16.msra.mxu0 %v778
        %918 = vmatmul.bf16.gmra.mxu0 %v830
        %v919 = vpop.f32.mrf.mxu0
        %v920 = vadd.f32 %v907, %v919
        %v921 = vpop.f32.mrf.mxu0
        %922 = vdwg.mxu0
        %v923 = vmax.f32 %v920, 0.0
        %v924 = vpack.c.bf16 %v923, %v923
        %v925 = vld [vmem:[#allocation7] sm:$0xf]
        %v926 = vld [vmem:[#allocation7 + $0x4] sm:$0xf]
        %v927 = vld [vmem:[#allocation7 + $0x8] sm:$0xf]
        %v928 = vld [vmem:[#allocation7 + $0xc] sm:$0xf]
        %v929 = vld [vmem:[#allocation7 + $0x10] sm:$0xf]
        %v930 = vld [vmem:[#allocation7 + $0x14] sm:$0xf]
        %v931 = vld [vmem:[#allocation7 + $0x18] sm:$0xf]
        %v932 = vld [vmem:[#allocation7 + $0x1c] sm:$0xf]
        %v933 = vld [vmem:[#allocation7 + $0x20] sm:$0xf]
        %v934 = vld [vmem:[#allocation7 + $0x24] sm:$0xf]
        %v935 = vld [vmem:[#allocation7 + $0x28] sm:$0xf]
        %v936 = vld [vmem:[#allocation7 + $0x2c] sm:$0xf]
        %v937 = vld [vmem:[#allocation7 + $0x30] sm:$0xf]
        %v938 = vld [vmem:[#allocation7 + $0x34] sm:$0xf]
        %v939 = vld [vmem:[#allocation7 + $0x38] sm:$0xf]
        %v940 = vld [vmem:[#allocation7 + $0x3c] sm:$0xf]
        %v941 = vld [vmem:[%s4] sm:$0x1]
        %v943 = vperm.slane %v941, 0
        %v961 = vunpack.c.l.b16 %v925
        %v962 = vunpack.c.l.b16 %v926
        %v963 = vunpack.c.l.b16 %v927
        %v964 = vunpack.c.l.b16 %v928
        %v965 = vunpack.c.l.b16 %v929
        %v966 = vunpack.c.l.b16 %v930
        %v967 = vunpack.c.l.b16 %v931
        %v968 = vunpack.c.l.b16 %v932
        %v969 = vunpack.c.l.b16 %v933
        %v970 = vunpack.c.l.b16 %v934
        %v971 = vunpack.c.l.b16 %v935
        %v972 = vunpack.c.l.b16 %v936
        %v973 = vunpack.c.l.b16 %v937
        %v974 = vunpack.c.l.b16 %v938
        %v975 = vunpack.c.l.b16 %v939
        %v976 = vunpack.c.l.b16 %v940
        %v977 = vpack.c.b16 %v962, %v961
        %v978 = vpack.c.b16 %v964, %v963
        %v979 = vpack.c.b16 %v966, %v965
        %v980 = vpack.c.b16 %v968, %v967
        %v981 = vpack.c.b16 %v970, %v969
        %v982 = vpack.c.b16 %v972, %v971
        %v983 = vpack.c.b16 %v974, %v973
        %v984 = vpack.c.b16 %v976, %v975
        %993 = vmatpush.bf16.msra.mxu0 %v984
        %994 = vmatpush.bf16.msra.mxu0 %v983
        %995 = vmatpush.bf16.msra.mxu0 %v982
        %996 = vmatpush.bf16.msra.mxu0 %v981
        %997 = vmatpush.bf16.msra.mxu0 %v980
        %998 = vmatpush.bf16.msra.mxu0 %v979
        %999 = vmatpush.bf16.msra.mxu0 %v978
        %1000 = vmatpush.bf16.msra.mxu0 %v977
        %1001 = vmatmul.bf16.gmra.mxu0 %v924
        %v1002 = vpop.f32.mrf.mxu0
        %v1003 = vadd.f32 %v943, %v1002
        %v1004 = vpop.f32.mrf.mxu0
        %1005 = vdwg.mxu0
        %v1006 = vmax.f32 %v1003, 0.0
        %v1007 = vpack.c.bf16 %v1006, %v1006
        %v1008 = vld [vmem:[#allocation8] sm:$0xf]
        %v1009 = vld [vmem:[#allocation8 + $0x4] sm:$0xf]
        %v1010 = vld [vmem:[#allocation8 + $0x8] sm:$0xf]
        %v1011 = vld [vmem:[#allocation8 + $0xc] sm:$0xf]
        %v1012 = vld [vmem:[#allocation8 + $0x10] sm:$0xf]
        %v1013 = vld [vmem:[#allocation8 + $0x14] sm:$0xf]
        %v1014 = vld [vmem:[#allocation8 + $0x18] sm:$0xf]
        %v1015 = vld [vmem:[#allocation8 + $0x1c] sm:$0xf]
        %v1016 = vld [vmem:[#allocation8 + $0x20] sm:$0xf]
        %v1017 = vld [vmem:[#allocation8 + $0x24] sm:$0xf]
        %v1018 = vld [vmem:[#allocation8 + $0x28] sm:$0xf]
        %v1019 = vld [vmem:[#allocation8 + $0x2c] sm:$0xf]
        %v1020 = vld [vmem:[#allocation8 + $0x30] sm:$0xf]
        %v1021 = vld [vmem:[#allocation8 + $0x34] sm:$0xf]
        %v1022 = vld [vmem:[#allocation8 + $0x38] sm:$0xf]
        %v1023 = vld [vmem:[#allocation8 + $0x3c] sm:$0xf]
        %v1024 = vld [vmem:[%s6] sm:$0x1]
        %v1026 = vperm.slane %v1024, 0
        %v1044 = vunpack.c.l.b16 %v1008
        %v1045 = vunpack.c.l.b16 %v1009
        %v1046 = vunpack.c.l.b16 %v1010
        %v1047 = vunpack.c.l.b16 %v1011
        %v1048 = vunpack.c.l.b16 %v1012
        %v1049 = vunpack.c.l.b16 %v1013
        %v1050 = vunpack.c.l.b16 %v1014
        %v1051 = vunpack.c.l.b16 %v1015
        %v1052 = vunpack.c.l.b16 %v1016
        %v1053 = vunpack.c.l.b16 %v1017
        %v1054 = vunpack.c.l.b16 %v1018
        %v1055 = vunpack.c.l.b16 %v1019
        %v1056 = vunpack.c.l.b16 %v1020
        %v1057 = vunpack.c.l.b16 %v1021
        %v1058 = vunpack.c.l.b16 %v1022
        %v1059 = vunpack.c.l.b16 %v1023
        %v1060 = vpack.c.b16 %v1045, %v1044
        %v1061 = vpack.c.b16 %v1047, %v1046
        %v1062 = vpack.c.b16 %v1049, %v1048
        %v1063 = vpack.c.b16 %v1051, %v1050
        %v1064 = vpack.c.b16 %v1053, %v1052
        %v1065 = vpack.c.b16 %v1055, %v1054
        %v1066 = vpack.c.b16 %v1057, %v1056
        %v1067 = vpack.c.b16 %v1059, %v1058
        %1076 = vmatpush.bf16.msra.mxu0 %v1067
        %1077 = vmatpush.bf16.msra.mxu0 %v1066
        %1078 = vmatpush.bf16.msra.mxu0 %v1065
        %1079 = vmatpush.bf16.msra.mxu0 %v1064
        %1080 = vmatpush.bf16.msra.mxu0 %v1063
        %1081 = vmatpush.bf16.msra.mxu0 %v1062
        %1082 = vmatpush.bf16.msra.mxu0 %v1061
        %1083 = vmatpush.bf16.msra.mxu0 %v1060
        %1084 = vmatmul.bf16.gmra.mxu0 %v1007
        %v1085 = vpop.f32.mrf.mxu0
        %v1086 = vadd.f32 %v1026, %v1085
        %v1087 = vpop.f32.mrf.mxu0
        %1088 = vdwg.mxu0
        %v1089 = vmax.f32 %v1086, 0.0
        %v1090 = vpack.c.bf16 %v1089, %v1089
        %v1091 = vld [vmem:[#allocation10] sm:$0xf]
        %v1092 = vld [vmem:[#allocation10 + $0x4] sm:$0xf]
        %v1093 = vld [vmem:[#allocation10 + $0x8] sm:$0xf]
        %v1094 = vld [vmem:[#allocation10 + $0xc] sm:$0xf]
        %v1095 = vld [vmem:[#allocation10 + $0x10] sm:$0xf]
        %v1096 = vld [vmem:[#allocation10 + $0x14] sm:$0xf]
        %v1097 = vld [vmem:[#allocation10 + $0x18] sm:$0xf]
        %v1098 = vld [vmem:[#allocation10 + $0x1c] sm:$0xf]
        %v1099 = vld [vmem:[#allocation10 + $0x20] sm:$0xf]
        %v1100 = vld [vmem:[#allocation10 + $0x24] sm:$0xf]
        %v1101 = vld [vmem:[#allocation10 + $0x28] sm:$0xf]
        %v1102 = vld [vmem:[#allocation10 + $0x2c] sm:$0xf]
        %v1103 = vld [vmem:[#allocation10 + $0x30] sm:$0xf]
        %v1104 = vld [vmem:[#allocation10 + $0x34] sm:$0xf]
        %v1105 = vld [vmem:[#allocation10 + $0x38] sm:$0xf]
        %v1106 = vld [vmem:[#allocation10 + $0x3c] sm:$0xf]
        %v1107 = vld [vmem:[%s8] sm:$0x1]
        %v1109 = vperm.slane %v1107, 0
        %v1127 = vunpack.c.l.b16 %v1091
        %v1128 = vunpack.c.l.b16 %v1092
        %v1129 = vunpack.c.l.b16 %v1093
        %v1130 = vunpack.c.l.b16 %v1094
        %v1131 = vunpack.c.l.b16 %v1095
        %v1132 = vunpack.c.l.b16 %v1096
        %v1133 = vunpack.c.l.b16 %v1097
        %v1134 = vunpack.c.l.b16 %v1098
        %v1135 = vunpack.c.l.b16 %v1099
        %v1136 = vunpack.c.l.b16 %v1100
        %v1137 = vunpack.c.l.b16 %v1101
        %v1138 = vunpack.c.l.b16 %v1102
        %v1139 = vunpack.c.l.b16 %v1103
        %v1140 = vunpack.c.l.b16 %v1104
        %v1141 = vunpack.c.l.b16 %v1105
        %v1142 = vunpack.c.l.b16 %v1106
        %v1143 = vpack.c.b16 %v1128, %v1127
        %v1144 = vpack.c.b16 %v1130, %v1129
        %v1145 = vpack.c.b16 %v1132, %v1131
        %v1146 = vpack.c.b16 %v1134, %v1133
        %v1147 = vpack.c.b16 %v1136, %v1135
        %v1148 = vpack.c.b16 %v1138, %v1137
        %v1149 = vpack.c.b16 %v1140, %v1139
        %v1150 = vpack.c.b16 %v1142, %v1141
        %1159 = vmatpush.bf16.msra.mxu0 %v1150
        %1160 = vmatpush.bf16.msra.mxu0 %v1149
        %1161 = vmatpush.bf16.msra.mxu0 %v1148
        %1162 = vmatpush.bf16.msra.mxu0 %v1147
        %1163 = vmatpush.bf16.msra.mxu0 %v1146
        %1164 = vmatpush.bf16.msra.mxu0 %v1145
        %1165 = vmatpush.bf16.msra.mxu0 %v1144
        %1166 = vmatpush.bf16.msra.mxu0 %v1143
        %1167 = vmatmul.bf16.gmra.mxu0 %v1090
        %v1168 = vpop.f32.mrf.mxu0
        %v1169 = vadd.f32 %v1109, %v1168
        %v1170 = vpop.f32.mrf.mxu0
        %1171 = vdwg.mxu0
        %1172 = vmax.xlane.f32.xlu0 %v1169
        %v1173 = vpop.xlane.xlu0 %1172
        %v1174 = vsub.f32 %v1169, %v1173
        %v1175 = vmul.f32 %v1174, 1.442695
        %v1176 = vpow.pop %v1175
        %1177 = vadd.xlane.f32.xlu0 %v1176
        %v1178 = vpop.xlane.xlu0 %1177
        %v1179 = vlog2.pop %v1178
        %v1180 = vmul.f32 %v1179, 0.6931472
        %v1181 = vsub.f32 %v1174, %v1180
        %1182 = vst [vmem:[%s416] sm:$0xff] %v1181
        %s1183 = sand.u32 %s230, 1
        %s1184 = scalar_lea.sflag [#allocation4], %s1183
        %s1185 = sand.u32 %s230, 1
        %s1186 = smul.addr %s1185, 8
        %s1187 = scalar_lea.vmem [#allocation11], %s1186
        // Predicated region
        $region77: #{tpu_custom_call.1} parent=55 // pred_check
          %p1188 = pneg %p240
        $region78: #{tpu_custom_call.1} parent=55 // pred_check_branch
          %1190 = sbr.rel (%p1188) target = $region80
        $region79: #{tpu_custom_call.1} parent=55 // pred_region
          %1192 = vsyncadd %s1184, 0
          %s1193 = smul.addr %s28, 8
          %s1194 = scalar_lea.hbm %s9, %s1193
          %s1196 = sshll.u32 %s1187, 4
          %s1197 = int_to_ptr.vmem [resolvable:$true] %s1196
          %s1198 = sshll.u32 %s1194, 4
          %s1199 = int_to_ptr.hbm [resolvable:$true] %s1198
          %1201 = dma.vmem_to_hbm [thread:$0]  %s1197, 128, %s1199, %s1184
        $region80: #{tpu_custom_call.1} parent=55 // pred_fallthru
          _
      $region56: #{tpu_custom_call.1} parent=5 // pred_fallthru
        _
      %p1202 = scmp.le.s32.totalorder 2, %s23
      // Predicated region
      $region81: #{tpu_custom_call.1} parent=5 // pred_check
        %p1203 = pneg %p1202
      $region82: #{tpu_custom_call.1} parent=5 // pred_check_branch
        %1205 = sbr.rel (%p1203) target = $region84
      $region83: #{tpu_custom_call.1} parent=5 // pred_region
        %s1206 = ssub.s32 %s23, 2
        // Predicated region
        $region85: #{tpu_custom_call.1} parent=83 // pred_check
          %p1207 = pneg %p246
        $region86: #{tpu_custom_call.1} parent=83 // pred_check_branch
          %1209 = sbr.rel (%p1207) target = $region88
        $region87: #{tpu_custom_call.1} parent=83 // pred_region
          %s1210 = sand.u32 %s231, 1
          %s1211 = scalar_lea.sflag [#allocation4], %s1210
          %s1212 = sand.u32 %s231, 1
          %s1213 = smul.addr %s1212, 8
          %s1214 = scalar_lea.vmem [#allocation11], %s1213
          %1216 = dma.done %s1211, 128
        $region88: #{tpu_custom_call.1} parent=83 // pred_fallthru
          _
      $region84: #{tpu_custom_call.1} parent=5 // pred_fallthru
        _
    $region6: #{tpu_custom_call.1} parent=1 // loop_footer
      %s27 = sadd.s32 1, %s23
    $region7: #{tpu_custom_call.1} parent=1 // loop_footer_branch
      %22 = sbr.rel target = $region3
    $region8: #{tpu_custom_call.1} parent=1 // loop_exit
      _
    %1217 = vsyncpa [#allocation3], 1
    %s1218 = scalar_lea.sflag [#allocation3], 1
    %1219 = vsyncpa %s1218, 1
    %1220 = vsyncpa [#allocation6], 1
    %1221 = vsyncpa [#allocation9], 1
    %1222 = vsyncpa [#allocation4], 1
    %s1223 = scalar_lea.sflag [#allocation4], 1
    %1224 = vsyncpa %s1223, 1

</llo_original>
